<compile_context>
chip_gen: v7x
topology: tpu7x:2x2x1
jax: 0.10.0
libtpu: 0.0.40
codegen_flags: <defaults>
</compile_context>

<pallas_src>
import functools

import jax
import jax.numpy as jnp
from jax.experimental import pallas as pl
from jax.experimental.pallas import tpu as pltpu

LARGE_NUM = 1000000000.0


# --------------------------------------------------------------------------
# Generation-aware tiling helpers
# --------------------------------------------------------------------------
def _num_tensorcores() -> int:
    """TensorCores per chip: 2 on v7x, 1 on v5e/v6e (conservative fallback 1)."""
    try:
        kind = jax.devices()[0].device_kind.lower()
    except Exception:
        return 1
    return 2 if "v7" in kind else 1


_N_CORES = _num_tensorcores()


def _choose_row_tile(m: int) -> int:
    """Row tile for flat-token kernels: full extent unless v7x can 2-way split."""
    if _N_CORES <= 1 or m % 16 != 0:
        return m
    return m // 2


def _choose_seq_chunk(n_seq: int, n_tok: int) -> int:
    """Sequences per grid step for the fused transformer-layer kernel."""
    if _N_CORES <= 1 or n_seq < 2:
        return n_seq          # single TensorCore: one grid step, no serial overhead
    half = n_seq // 2
    if n_seq % 2 == 0 and (half * n_tok) % 8 == 0:
        return half           # v7x: two 'parallel' grid steps, one per TensorCore
    return n_seq              # ragged (e.g. temporal tf) -> keep one aligned full step


# --------------------------------------------------------------------------
# Small in-kernel helpers
# --------------------------------------------------------------------------
def _layernorm_f32(x, g, b):
    mu = jnp.mean(x, axis=-1, keepdims=True)
    xc = x - mu
    var = jnp.mean(xc * xc, axis=-1, keepdims=True)   # biased, like nn.LayerNorm
    return xc * jax.lax.rsqrt(var + 1e-5) * g + b


def _gelu_tanh(x):
    # TODO(synk): PyTorch nn.GELU uses the exact erf form; the tanh approximation
    # (EUP tanh slot) deviates at the ~1e-3 level.
    c = 0.7978845608028654  # sqrt(2/pi)
    return 0.5 * x * (1.0 + jnp.tanh(c * (x + 0.044715 * x * x * x)))


def _block_diag_bias(seqs: int, n_tok: int) -> jnp.ndarray:
    """Additive attention mask: 0 within a sequence, -1e9 across sequences."""
    ids = jnp.repeat(jnp.arange(seqs, dtype=jnp.int32), n_tok)
    same = ids[:, None] == ids[None, :]
    return jnp.where(same, 0.0, -1e9).astype(jnp.float32)


# --------------------------------------------------------------------------
# Pallas kernels
# --------------------------------------------------------------------------
def _linear_kernel(x_ref, w_ref, b_ref, o_ref):
    y = jnp.dot(x_ref[...].astype(jnp.bfloat16), w_ref[...],
                preferred_element_type=jnp.float32) + b_ref[...]
    o_ref[...] = y.astype(o_ref.dtype)


def pallas_linear(x2, w, b):
    """Patch embedding: y = x @ W + b; x2: (M, K) flat tokens."""
    m, k = x2.shape
    n = w.shape[1]
    tm = _choose_row_tile(m)
    return pl.pallas_call(
        _linear_kernel,
        out_shape=jax.ShapeDtypeStruct((m, n), jnp.float32),
        grid=(m // tm,),
        in_specs=[pl.BlockSpec((tm, k), lambda i: (i, 0)),
                  pl.BlockSpec((k, n), lambda i: (0, 0)),
                  pl.BlockSpec((1, n), lambda i: (0, 0))],
        out_specs=pl.BlockSpec((tm, n), lambda i: (i, 0)),
        compiler_params=pltpu.CompilerParams(dimension_semantics=("parallel",)),
    )(x2, w.astype(jnp.bfloat16), b.reshape(1, n).astype(jnp.float32))


def _fused_layer_kernel(x_ref, bias_ref, ln1g_ref, ln1b_ref, wqkv_ref,
                        wout_ref, bout_ref, ln2g_ref, ln2b_ref,
                        w1_ref, b1_ref, w2_ref, b2_ref, fng_ref, fnb_ref,
                        o_ref, qkv_scr, av_scr, *,
                        heads, dim_head, apply_final_norm):
    """Full pre-norm transformer layer (attention + FFN), weights VMEM-resident."""
    inner = heads * dim_head
    scale = dim_head ** -0.5

    x = x_ref[...].astype(jnp.float32)                               # (rows, D)

    # ---- LN1 + QKV projection, batched over every token in the block ----
    xn = _layernorm_f32(x, ln1g_ref[...], ln1b_ref[...])
    qkv_scr[...] = jnp.dot(xn.astype(jnp.bfloat16), wqkv_ref[...],
                           preferred_element_type=jnp.float32)       # (rows, 3*inner)

    # ---- attention, batched with a block-diagonal mask (no per-seq loop) ----
    # TODO(synk): scores are O(rows^2); fine for tiny token counts (5/9), switch
    # to a per-sequence / flash-style loop for large sequence lengths.
    bias = bias_ref[...]
    for h in range(heads):                                           # heads == 2
        q = qkv_scr[:, h * dim_head:(h + 1) * dim_head].astype(jnp.bfloat16)
        k = qkv_scr[:, inner + h * dim_head: inner + (h + 1) * dim_head].astype(jnp.bfloat16)
        v = qkv_scr[:, 2 * inner + h * dim_head: 2 * inner + (h + 1) * dim_head].astype(jnp.bfloat16)
        # bf16 QK^T contracting dim_head directly (no explicit transpose).
        dots = jax.lax.dot_general(q, k, (((1,), (1,)), ((), ())),
                                   preferred_element_type=jnp.float32)
        dots = dots * scale + bias
        dots = dots - jnp.max(dots, axis=-1, keepdims=True)
        p = jnp.exp(dots)
        p = p * pl.reciprocal(jnp.sum(p, axis=-1, keepdims=True), approx=True)
        av = jnp.dot(p.astype(jnp.bfloat16), v,
                     preferred_element_type=jnp.float32)             # (rows, dim_head)
        av_scr[:, h * dim_head:(h + 1) * dim_head] = av              # heads side-by-side

    # ---- single K=128 out-projection + residual ----
    attn = jnp.dot(av_scr[...].astype(jnp.bfloat16), wout_ref[...],
                   preferred_element_type=jnp.float32) + bout_ref[...]
    x = x + attn

    # ---- LN2 + FFN + residual ----
    xn2 = _layernorm_f32(x, ln2g_ref[...], ln2b_ref[...])
    h1 = jnp.dot(xn2.astype(jnp.bfloat16), w1_ref[...],
                 preferred_element_type=jnp.float32) + b1_ref[...]
    h1 = _gelu_tanh(h1)
    y = jnp.dot(h1.astype(jnp.bfloat16), w2_ref[...],
                preferred_element_type=jnp.float32) + b2_ref[...]
    out = x + y

    if apply_final_norm:        # space transformer's final LN folded in here
        out = _layernorm_f32(out, fng_ref[...], fnb_ref[...])
    o_ref[...] = out.astype(o_ref.dtype)


def pallas_transformer_layer(x2, layer, heads, dim_head, n_tok, seqs,
                             final_g, final_b, apply_final_norm):
    m, d = x2.shape
    inner = heads * dim_head
    hdim = layer["ff_w1"].shape[1]
    rows = seqs * n_tok
    bias = _block_diag_bias(seqs, n_tok)                 # same pattern every block
    row1 = lambda a: a.reshape(1, -1).astype(jnp.float32)
    # TODO(synk): at production dims (768/3072) tile the FFN hidden dim with a
    # reduction grid axis, single-buffer the grid-invariant weight specs and set
    # vmem_limit_bytes explicitly; at dim=192 resident weights are <1 MB.
    return pl.pallas_call(
        functools.partial(_fused_layer_kernel, heads=heads, dim_head=dim_head,
                          apply_final_norm=apply_final_norm),
        out_shape=jax.ShapeDtypeStruct((m, d), jnp.float32),
        grid=(m // rows,),
        in_specs=[pl.BlockSpec((rows, d), lambda i: (i, 0)),
                  pl.BlockSpec((rows, rows), lambda i: (0, 0)),
                  pl.BlockSpec((1, d), lambda i: (0, 0)),
                  pl.BlockSpec((1, d), lambda i: (0, 0)),
                  pl.BlockSpec((d, 3 * inner), lambda i: (0, 0)),
                  pl.BlockSpec((inner, d), lambda i: (0, 0)),
                  pl.BlockSpec((1, d), lambda i: (0, 0)),
                  pl.BlockSpec((1, d), lambda i: (0, 0)),
                  pl.BlockSpec((1, d), lambda i: (0, 0)),
                  pl.BlockSpec((d, hdim), lambda i: (0, 0)),
                  pl.BlockSpec((1, hdim), lambda i: (0, 0)),
                  pl.BlockSpec((hdim, d), lambda i: (0, 0)),
                  pl.BlockSpec((1, d), lambda i: (0, 0)),
                  pl.BlockSpec((1, d), lambda i: (0, 0)),
                  pl.BlockSpec((1, d), lambda i: (0, 0))],
        out_specs=pl.BlockSpec((rows, d), lambda i: (i, 0)),
        scratch_shapes=[pltpu.VMEM((rows, 3 * inner), jnp.float32),
                        pltpu.VMEM((rows, inner), jnp.float32)],
        compiler_params=pltpu.CompilerParams(dimension_semantics=("parallel",)),
    )(x2, bias,
      row1(layer["ln1_g"]), row1(layer["ln1_b"]),
      layer["w_qkv"].astype(jnp.bfloat16),
      layer["w_out"].astype(jnp.bfloat16), row1(layer["b_out"]),
      row1(layer["ln2_g"]), row1(layer["ln2_b"]),
      layer["ff_w1"].astype(jnp.bfloat16), row1(layer["ff_b1"]),
      layer["ff_w2"].astype(jnp.bfloat16), row1(layer["ff_b2"]),
      row1(final_g), row1(final_b))


def _final_heads_kernel(xt_ref, ng_ref, nb_ref, pool_ref,
                        wsp_ref, bsp_ref, wtm_ref, btm_ref,
                        wp1_ref, bp1_ref, wp2_ref, bp2_ref,
                        sp_ref, tm_ref, logit_ref, *, temperature):
    """Fused temporal final LN + mean pool + classifiers + proj head + SimCLR sims."""
    x = xt_ref[...].astype(jnp.float32)                               # (b*(t+1), D)
    xn = _layernorm_f32(x, ng_ref[...], nb_ref[...])
    q = jnp.dot(pool_ref[...], xn, preferred_element_type=jnp.float32)  # (2B, D) mean pool
    qb = q.astype(jnp.bfloat16)
    sp_ref[...] = (jnp.dot(qb, wsp_ref[...], preferred_element_type=jnp.float32)
                   + bsp_ref[...]).astype(sp_ref.dtype)
    tm_ref[...] = (jnp.dot(qb, wtm_ref[...], preferred_element_type=jnp.float32)
                   + btm_ref[...]).astype(tm_ref.dtype)
    h = jnp.dot(qb, wp1_ref[...], preferred_element_type=jnp.float32) + bp1_ref[...]
    h = jnp.maximum(h, 0.0)
    p = jnp.dot(h.astype(jnp.bfloat16), wp2_ref[...],
                preferred_element_type=jnp.float32) + bp2_ref[...]
    # F.normalize (L2, eps=1e-12), f32
    nrm = jnp.sqrt(jnp.sum(p * p, axis=-1, keepdims=True))
    pn = p / jnp.maximum(nrm, 1e-12)
    sim = jax.lax.dot_general(pn, pn, (((1,), (1,)), ((), ())),
                              preferred_element_type=jnp.float32)     # (2B, 2B)
    n = sim.shape[0]
    eye = (jax.lax.broadcasted_iota(jnp.int32, (n, n), 0)
           == jax.lax.broadcasted_iota(jnp.int32, (n, n), 1)).astype(jnp.float32)
    logit_ref[...] = (sim - eye * LARGE_NUM) * (1.0 / temperature)


def pallas_final_heads(xt_flat, norm_g, norm_b, params, tokens_per_seq, temperature):
    m, d = xt_flat.shape
    nb = m // tokens_per_seq
    pool = jnp.repeat(jnp.eye(nb, dtype=jnp.float32), tokens_per_seq, axis=1)
    pool = pool / float(tokens_per_seq)
    n_sp = params["w_sp"].shape[1]
    n_tm = params["w_tm"].shape[1]
    n_cls = params["w_p2"].shape[1]
    row1 = lambda a: a.reshape(1, -1).astype(jnp.float32)
    return pl.pallas_call(
        functools.partial(_final_heads_kernel, temperature=float(temperature)),
        out_shape=(jax.ShapeDtypeStruct((nb, n_sp), jnp.float32),
                   jax.ShapeDtypeStruct((nb, n_tm), jnp.float32),
                   jax.ShapeDtypeStruct((nb, nb), jnp.float32)),
        grid=(1,),
        in_specs=[pl.BlockSpec((m, d), lambda i: (0, 0)),
                  pl.BlockSpec((1, d), lambda i: (0, 0)),
                  pl.BlockSpec((1, d), lambda i: (0, 0)),
                  pl.BlockSpec((nb, m), lambda i: (0, 0)),
                  pl.BlockSpec((d, n_sp), lambda i: (0, 0)),
                  pl.BlockSpec((1, n_sp), lambda i: (0, 0)),
                  pl.BlockSpec((d, n_tm), lambda i: (0, 0)),
                  pl.BlockSpec((1, n_tm), lambda i: (0, 0)),
                  pl.BlockSpec((d, d), lambda i: (0, 0)),
                  pl.BlockSpec((1, d), lambda i: (0, 0)),
                  pl.BlockSpec((d, n_cls), lambda i: (0, 0)),
                  pl.BlockSpec((1, n_cls), lambda i: (0, 0))],
        out_specs=(pl.BlockSpec((nb, n_sp), lambda i: (0, 0)),
                   pl.BlockSpec((nb, n_tm), lambda i: (0, 0)),
                   pl.BlockSpec((nb, nb), lambda i: (0, 0))),
    )(xt_flat, row1(norm_g), row1(norm_b), pool,
      params["w_sp"].astype(jnp.bfloat16), row1(params["b_sp"]),
      params["w_tm"].astype(jnp.bfloat16), row1(params["b_tm"]),
      params["w_p1"].astype(jnp.bfloat16), row1(params["b_p1"]),
      params["w_p2"].astype(jnp.bfloat16), row1(params["b_p2"]))


# --------------------------------------------------------------------------
# Model (ViViT encoder + SLF-RPM heads) built on the kernels above
# --------------------------------------------------------------------------
def run_transformer(x3, tparams, heads, dim_head, apply_final_norm):
    """Pre-norm transformer; if apply_final_norm, the final LN is folded into
    the last fused layer kernel, otherwise the caller applies it downstream."""
    bb, n_tok, d = x3.shape
    seqs = _choose_seq_chunk(bb, n_tok)
    x2 = x3.reshape(bb * n_tok, d)
    n_layers = len(tparams["layers"])
    for li, layer in enumerate(tparams["layers"]):
        fold_norm = apply_final_norm and (li == n_layers - 1)
        x2 = pallas_transformer_layer(x2, layer, heads, dim_head, n_tok, seqs,
                                      tparams["norm_g"], tparams["norm_b"],
                                      fold_norm)
    return x2.reshape(bb, n_tok, d)


def vivit_forward(x, params, cfg):
    """x: (b, t, C, H, W) -> (b, t+1, dim) pre-final-norm temporal tokens."""
    b, t, c, hgt, wid = x.shape
    p = cfg["patch_size"]
    dim = cfg["dim"]
    hh, ww = hgt // p, wid // p
    # einops: 'b t c (h p1) (w p2) -> b t (h w) (p1 p2 c)'
    xp = x.reshape(b, t, c, hh, p, ww, p)
    xp = xp.transpose(0, 1, 3, 5, 4, 6, 2)
    xp = xp.reshape(b, t, hh * ww, p * p * c)
    n = hh * ww
    patch_dim = p * p * c
    xt = pallas_linear(xp.reshape(-1, patch_dim), params["w_patch"], params["b_patch"])
    xt = xt.reshape(b, t, n, dim)
    cls_space = jnp.broadcast_to(params["space_token"].reshape(1, 1, 1, dim),
                                 (b, t, 1, dim))
    xt = jnp.concatenate([cls_space, xt], axis=2)                 # (b, t, n+1, dim)
    xt = xt + params["pos_emb"][:, :, :n + 1]
    xt = xt.reshape(b * t, n + 1, dim)
    # Space transformer; its final LN is folded into the last layer kernel.
    xt = run_transformer(xt, params["space_tf"], cfg["heads"], cfg["dim_head"],
                         apply_final_norm=True)
    cls_sp = xt[:, 0].reshape(b, t, dim)                          # normalized CLS tokens
    cls_temporal = jnp.broadcast_to(params["temporal_token"].reshape(1, 1, dim),
                                    (b, 1, dim))
    xt = jnp.concatenate([cls_temporal, cls_sp], axis=1)          # (b, t+1, dim)
    # Temporal transformer; its final LN is folded into the fused heads kernel.
    xt = run_transformer(xt, params["temporal_tf"], cfg["heads"], cfg["dim_head"],
                         apply_final_norm=False)
    return xt


def slf_rpm_forward(vids, params, cfg):
    x = jnp.concatenate(list(vids), axis=0)                 # (2*n_video, T, C, H, W)
    enc = params["encoder"]
    xt = vivit_forward(x, enc, cfg)                          # (2B, t+1, dim)
    b2, ntok, dim = xt.shape

    # One fused kernel: temporal final LN + mean pool + spatial/temporal
    # classifiers + projection head + L2-normalize + SimCLR similarity matrix.
    pred_spatial, pred_temporal, full = pallas_final_heads(
        xt.reshape(b2 * ntok, dim), enc["temporal_tf"]["norm_g"],
        enc["temporal_tf"]["norm_b"], params, ntok, cfg["temperature"])

    B = b2 // 2
    logits_a = jnp.concatenate([full[:B, B:], full[:B, :B]], axis=1)   # [ab, aa-mask]
    logits_b = jnp.concatenate([full[B:, :B], full[B:, B:]], axis=1)   # [ba, bb-mask]
    logits = jnp.concatenate([logits_a, logits_b], axis=0)
    labels = jnp.concatenate([jnp.arange(B, dtype=jnp.int32),
                              jnp.arange(B, dtype=jnp.int32)], axis=0)
    return logits, labels, pred_spatial, pred_temporal


# --------------------------------------------------------------------------
# Deterministic synthetic parameter init (shapes follow SLF_RPM.__init__)
# --------------------------------------------------------------------------
def _dense_init(key, shape, scale=0.02):
    return scale * jax.random.normal(key, shape, jnp.float32)


def init_transformer(key, dim, depth, heads, dim_head, mlp_dim):
    inner = heads * dim_head
    layers = []
    for _ in range(depth):
        key, k0, k1, k2, k3 = jax.random.split(key, 5)
        layers.append(dict(
            ln1_g=jnp.ones((dim,), jnp.float32), ln1_b=jnp.zeros((dim,), jnp.float32),
            w_qkv=_dense_init(k0, (dim, 3 * inner)),                 # no bias (to_qkv)
            w_out=_dense_init(k1, (inner, dim)),
            b_out=jnp.zeros((dim,), jnp.float32),
            ln2_g=jnp.ones((dim,), jnp.float32), ln2_b=jnp.zeros((dim,), jnp.float32),
            ff_w1=_dense_init(k2, (dim, mlp_dim)), ff_b1=jnp.zeros((mlp_dim,), jnp.float32),
            ff_w2=_dense_init(k3, (mlp_dim, dim)), ff_b2=jnp.zeros((dim,), jnp.float32),
        ))
    return dict(layers=layers,
                norm_g=jnp.ones((dim,), jnp.float32),
                norm_b=jnp.zeros((dim,), jnp.float32))


def init_params(key, cfg):
    dim = cfg["dim"]
    patch_dim = 3 * cfg["patch_size"] ** 2
    n_patches = (cfg["image_size"] // cfg["patch_size"]) ** 2
    ks = jax.random.split(key, 12)
    enc = dict(
        w_patch=_dense_init(ks[0], (patch_dim, dim)),
        b_patch=jnp.zeros((dim,), jnp.float32),
        pos_emb=jax.random.normal(ks[1], (1, cfg["num_frames"], n_patches + 1, dim),
                                  jnp.float32),
        space_token=jax.random.normal(ks[2], (1, 1, dim), jnp.float32),
        temporal_token=jax.random.normal(ks[3], (1, 1, dim), jnp.float32),
        space_tf=init_transformer(ks[4], dim, cfg["depth"], cfg["heads"],
                                  cfg["dim_head"], dim * 4),
        temporal_tf=init_transformer(ks[5], dim, cfg["depth"], cfg["heads"],
                                     cfg["dim_head"], dim * 4),
    )
    return dict(
        encoder=enc,
        w_sp=_dense_init(ks[6], (dim, cfg["n_spatial"])),
        b_sp=jnp.zeros((cfg["n_spatial"],), jnp.float32),
        w_tm=_dense_init(ks[7], (dim, cfg["n_temporal"])),
        b_tm=jnp.zeros((cfg["n_temporal"],), jnp.float32),
        w_p1=_dense_init(ks[8], (dim, dim)), b_p1=jnp.zeros((dim,), jnp.float32),
        w_p2=_dense_init(ks[9], (dim, cfg["n_class"])),
        b_p2=jnp.zeros((cfg["n_class"],), jnp.float32),
    )


# --------------------------------------------------------------------------
if __name__ == "__main__":
    # Small shapes consistent with the module: ViViT(patch=16, dim=192, heads=2,
    # dim_head=64, depth=2, pool='mean'); image/frames reduced for the demo.
    cfg = dict(image_size=32, patch_size=16, num_frames=8, dim=192, depth=2,
               heads=2, dim_head=64, n_class=16, n_spatial=5, n_temporal=3,
               temperature=0.5)
    key = jax.random.PRNGKey(0)
    kp, ka, kb = jax.random.split(key, 3)
    params = init_params(kp, cfg)

    n_video = 2
    vshape = (n_video, cfg["num_frames"], 3, cfg["image_size"], cfg["image_size"])
    vid_a = jax.random.normal(ka, vshape, jnp.float32)
    vid_b = jax.random.normal(kb, vshape, jnp.float32)

    logits, labels, pred_spatial, pred_temporal = slf_rpm_forward(
        [vid_a, vid_b], params, cfg)
    jax.block_until_ready((logits, labels, pred_spatial, pred_temporal))

    assert logits.shape == (2 * n_video, 2 * n_video)
    assert labels.shape == (2 * n_video,)
    assert pred_spatial.shape == (2 * n_video, cfg["n_spatial"])
    assert pred_temporal.shape == (2 * n_video, cfg["n_temporal"])
    assert bool(jnp.all(jnp.isfinite(logits)))
    assert bool(jnp.all(jnp.isfinite(pred_spatial)))
    assert bool(jnp.all(jnp.isfinite(pred_temporal)))
    print("KERNEL_OK")
</pallas_src>

<mosaic_0001>
module attributes {stable_mosaic.version = 11 : i64} {
  func.func @_linear_kernel(%arg0: i32, %arg1: memref<128x768xf32, #tpu.memory_space<vmem>>, %arg2: memref<768x192xbf16, #tpu.memory_space<vmem>>, %arg3: memref<1x192xf32, #tpu.memory_space<vmem>>, %arg4: memref<128x192xf32, #tpu.memory_space<vmem>>) attributes {dimension_semantics = [#tpu.dimension_semantics<parallel>], iteration_bounds = array<i64: 1>, scalar_prefetch = 0 : i64, scratch_operands = 0 : i64, tpu.core_type = #tpu.core_type<tc>, window_params = [{transform_indices = @transform_0, window_bounds = array<i64: 128, 768>}, {pipeline_mode = #tpu.pipeline_mode<synchronous>, transform_indices = @transform_1, window_bounds = array<i64: 768, 192>}, {pipeline_mode = #tpu.pipeline_mode<synchronous>, transform_indices = @transform_2, window_bounds = array<i64: 1, 192>}, {transform_indices = @transform_3, window_bounds = array<i64: 128, 192>}]} {
    %c0 = arith.constant 0 : index
    %c0_0 = arith.constant 0 : index
    %0 = vector.load %arg1[%c0, %c0_0] : memref<128x768xf32, #tpu.memory_space<vmem>>, vector<128x768xf32>
    %1 = arith.truncf %0 : vector<128x768xf32> to vector<128x768xbf16>
    %c0_1 = arith.constant 0 : index
    %c0_2 = arith.constant 0 : index
    %2 = vector.load %arg2[%c0_1, %c0_2] : memref<768x192xbf16, #tpu.memory_space<vmem>>, vector<768x192xbf16>
    %cst = arith.constant dense<0.000000e+00> : vector<128x192xf32>
    %3 = tpu.matmul %1, %2, %cst {dimension_numbers = #tpu.dot_dimension_numbers<[1], [0], [0], [1], [0, 0, 1, 1], [], []>} : vector<128x768xbf16>, vector<768x192xbf16>, vector<128x192xf32> -> vector<128x192xf32>
    %c0_3 = arith.constant 0 : index
    %c0_4 = arith.constant 0 : index
    %4 = vector.load %arg3[%c0_3, %c0_4] : memref<1x192xf32, #tpu.memory_space<vmem>>, vector<1x192xf32>
    %5 = vector.broadcast %4 : vector<1x192xf32> to vector<128x192xf32>
    %6 = arith.addf %3, %5 : vector<128x192xf32>
    %c0_5 = arith.constant 0 : index
    %c0_6 = arith.constant 0 : index
    %7 = vector.load %arg4[%c0_5, %c0_6] : memref<128x192xf32, #tpu.memory_space<vmem>>, vector<128x192xf32>
    tpu.vector_store %arg4[%c0_5, %c0_6], %6 {strides = array<i32>} : memref<128x192xf32, #tpu.memory_space<vmem>>, vector<128x192xf32>,
    return
  }
  func.func @transform_0(%arg0: i32) -> (i32, i32) {
    %c0_i32 = arith.constant 0 : i32
    %c0_i32_0 = arith.constant 0 : i32
    return %arg0, %c0_i32 : i32, i32
  }
  func.func @transform_1(%arg0: i32) -> (i32, i32) {
    %c0_i32 = arith.constant 0 : i32
    %c0_i32_0 = arith.constant 0 : i32
    %c0_i32_1 = arith.constant 0 : i32
    return %c0_i32, %c0_i32_0 : i32, i32
  }
  func.func @transform_2(%arg0: i32) -> (i32, i32) {
    %c0_i32 = arith.constant 0 : i32
    %c0_i32_0 = arith.constant 0 : i32
    %c0_i32_1 = arith.constant 0 : i32
    return %c0_i32, %c0_i32_0 : i32, i32
  }
  func.func @transform_3(%arg0: i32) -> (i32, i32) {
    %c0_i32 = arith.constant 0 : i32
    %c0_i32_0 = arith.constant 0 : i32
    return %arg0, %c0_i32 : i32, i32
  }
}

</mosaic_0001>

<llo_original>
// kernel: tpu_custom_call.1
$region0: #{tpu_custom_call.1}
  #allocation0 [shape = 'u32[]', space=smem, size = 0x4, offset = 0x4, fixed_abs, tag = 'smem constant byte address 0x4 - core index']
  #allocation1 [shape = 'u32[144,128]{1,0:T(1,128)}', space=vmem, size = 0x12000, scoped, tag = 'internal scratch']
  %s0 = inlined_call_operand.vmem [shape: f32[128,768], index: 0, kind: input, shape index: {}]
  %s1 = inlined_call_operand.vmem [shape: bf16[768,192], index: 1, kind: input, shape index: {}]
  %s2 = inlined_call_operand.vmem [shape: f32[1,192], index: 2, kind: input, shape index: {}]
  %s3 = inlined_call_operand.vmem [shape: f32[128,192], index: 3, kind: output, shape index: {}]
  %s4 = sld [smem:[#allocation0]]
  $region22: #{tpu_custom_call.1} parent=0
    _
  %s6 = ssub.s32 1, %s4
  %s7 = scalar_select 0, %s6, %s4
  // Predicated region
  $region2: #{tpu_custom_call.1} parent=0 // pred_check
    _
  $region3: #{tpu_custom_call.1} parent=0 // pred_check_branch
    %9 = sbr.rel (0) target = $region5
  $region4: #{tpu_custom_call.1} parent=0 // pred_region
    _
  $region5: #{tpu_custom_call.1} parent=0 // pred_fallthru
    _
  // Predicated region
  $region6: #{tpu_custom_call.1} parent=0 // pred_check
    _
  $region7: #{tpu_custom_call.1} parent=0 // pred_check_branch
    %11 = sbr.rel (0) target = $region9
  $region8: #{tpu_custom_call.1} parent=0 // pred_region
    _
  $region9: #{tpu_custom_call.1} parent=0 // pred_fallthru
    _
  // Predicated region
  $region10: #{tpu_custom_call.1} parent=0 // pred_check
    _
  $region11: #{tpu_custom_call.1} parent=0 // pred_check_branch
    %13 = sbr.rel (0) target = $region13
  $region12: #{tpu_custom_call.1} parent=0 // pred_region
    _
  $region13: #{tpu_custom_call.1} parent=0 // pred_fallthru
    _
  %v14 = vld [vmem:[%s0] sm:$0xff]
  %v15 = vld [vmem:[%s0 + $0x8] sm:$0xff]
  %v16 = vld [vmem:[%s0 + $0x10] sm:$0xff]
  %v17 = vld [vmem:[%s0 + $0x18] sm:$0xff]
  %v18 = vld [vmem:[%s0 + $0x20] sm:$0xff]
  %v19 = vld [vmem:[%s0 + $0x28] sm:$0xff]
  %v20 = vld [vmem:[%s0 + $0x30] sm:$0xff]
  %v21 = vld [vmem:[%s0 + $0x38] sm:$0xff]
  %v22 = vld [vmem:[%s0 + $0x40] sm:$0xff]
  %v23 = vld [vmem:[%s0 + $0x48] sm:$0xff]
  %v24 = vld [vmem:[%s0 + $0x50] sm:$0xff]
  %v25 = vld [vmem:[%s0 + $0x58] sm:$0xff]
  %v26 = vld [vmem:[%s0 + $0x60] sm:$0xff]
  %v27 = vld [vmem:[%s0 + $0x68] sm:$0xff]
  %v28 = vld [vmem:[%s0 + $0x70] sm:$0xff]
  %v29 = vld [vmem:[%s0 + $0x78] sm:$0xff]
  %v30 = vld [vmem:[%s0 + $0x80] sm:$0xff]
  %v31 = vld [vmem:[%s0 + $0x88] sm:$0xff]
  %v32 = vld [vmem:[%s0 + $0x90] sm:$0xff]
  %v33 = vld [vmem:[%s0 + $0x98] sm:$0xff]
  %v34 = vld [vmem:[%s0 + $0xa0] sm:$0xff]
  %v35 = vld [vmem:[%s0 + $0xa8] sm:$0xff]
  %v36 = vld [vmem:[%s0 + $0xb0] sm:$0xff]
  %v37 = vld [vmem:[%s0 + $0xb8] sm:$0xff]
  %v38 = vld [vmem:[%s0 + $0xc0] sm:$0xff]
  %v39 = vld [vmem:[%s0 + $0xc8] sm:$0xff]
  %v40 = vld [vmem:[%s0 + $0xd0] sm:$0xff]
  %v41 = vld [vmem:[%s0 + $0xd8] sm:$0xff]
  %v42 = vld [vmem:[%s0 + $0xe0] sm:$0xff]
  %v43 = vld [vmem:[%s0 + $0xe8] sm:$0xff]
  %v44 = vld [vmem:[%s0 + $0xf0] sm:$0xff]
  %v45 = vld [vmem:[%s0 + $0xf8] sm:$0xff]
  %v46 = vld [vmem:[%s0 + $0x100] sm:$0xff]
  %v47 = vld [vmem:[%s0 + $0x108] sm:$0xff]
  %v48 = vld [vmem:[%s0 + $0x110] sm:$0xff]
  %v49 = vld [vmem:[%s0 + $0x118] sm:$0xff]
  %v50 = vld [vmem:[%s0 + $0x120] sm:$0xff]
  %v51 = vld [vmem:[%s0 + $0x128] sm:$0xff]
  %v52 = vld [vmem:[%s0 + $0x130] sm:$0xff]
  %v53 = vld [vmem:[%s0 + $0x138] sm:$0xff]
  %v54 = vld [vmem:[%s0 + $0x140] sm:$0xff]
  %v55 = vld [vmem:[%s0 + $0x148] sm:$0xff]
  %v56 = vld [vmem:[%s0 + $0x150] sm:$0xff]
  %v57 = vld [vmem:[%s0 + $0x158] sm:$0xff]
  %v58 = vld [vmem:[%s0 + $0x160] sm:$0xff]
  %v59 = vld [vmem:[%s0 + $0x168] sm:$0xff]
  %v60 = vld [vmem:[%s0 + $0x170] sm:$0xff]
  %v61 = vld [vmem:[%s0 + $0x178] sm:$0xff]
  %v62 = vld [vmem:[%s0 + $0x180] sm:$0xff]
  %v63 = vld [vmem:[%s0 + $0x188] sm:$0xff]
  %v64 = vld [vmem:[%s0 + $0x190] sm:$0xff]
  %v65 = vld [vmem:[%s0 + $0x198] sm:$0xff]
  %v66 = vld [vmem:[%s0 + $0x1a0] sm:$0xff]
  %v67 = vld [vmem:[%s0 + $0x1a8] sm:$0xff]
  %v68 = vld [vmem:[%s0 + $0x1b0] sm:$0xff]
  %v69 = vld [vmem:[%s0 + $0x1b8] sm:$0xff]
  %v70 = vld [vmem:[%s0 + $0x1c0] sm:$0xff]
  %v71 = vld [vmem:[%s0 + $0x1c8] sm:$0xff]
  %v72 = vld [vmem:[%s0 + $0x1d0] sm:$0xff]
  %v73 = vld [vmem:[%s0 + $0x1d8] sm:$0xff]
  %v74 = vld [vmem:[%s0 + $0x1e0] sm:$0xff]
  %v75 = vld [vmem:[%s0 + $0x1e8] sm:$0xff]
  %v76 = vld [vmem:[%s0 + $0x1f0] sm:$0xff]
  %v77 = vld [vmem:[%s0 + $0x1f8] sm:$0xff]
  %v78 = vld [vmem:[%s0 + $0x200] sm:$0xff]
  %v79 = vld [vmem:[%s0 + $0x208] sm:$0xff]
  %v80 = vld [vmem:[%s0 + $0x210] sm:$0xff]
  %v81 = vld [vmem:[%s0 + $0x218] sm:$0xff]
  %v82 = vld [vmem:[%s0 + $0x220] sm:$0xff]
  %v83 = vld [vmem:[%s0 + $0x228] sm:$0xff]
  %v84 = vld [vmem:[%s0 + $0x230] sm:$0xff]
  %v85 = vld [vmem:[%s0 + $0x238] sm:$0xff]
  %v86 = vld [vmem:[%s0 + $0x240] sm:$0xff]
  %v87 = vld [vmem:[%s0 + $0x248] sm:$0xff]
  %v88 = vld [vmem:[%s0 + $0x250] sm:$0xff]
  %v89 = vld [vmem:[%s0 + $0x258] sm:$0xff]
  %v90 = vld [vmem:[%s0 + $0x260] sm:$0xff]
  %v91 = vld [vmem:[%s0 + $0x268] sm:$0xff]
  %v92 = vld [vmem:[%s0 + $0x270] sm:$0xff]
  %v93 = vld [vmem:[%s0 + $0x278] sm:$0xff]
  %v94 = vld [vmem:[%s0 + $0x280] sm:$0xff]
  %v95 = vld [vmem:[%s0 + $0x288] sm:$0xff]
  %v96 = vld [vmem:[%s0 + $0x290] sm:$0xff]
  %v97 = vld [vmem:[%s0 + $0x298] sm:$0xff]
  %v98 = vld [vmem:[%s0 + $0x2a0] sm:$0xff]
  %v99 = vld [vmem:[%s0 + $0x2a8] sm:$0xff]
  %v100 = vld [vmem:[%s0 + $0x2b0] sm:$0xff]
  %v101 = vld [vmem:[%s0 + $0x2b8] sm:$0xff]
  %v102 = vld [vmem:[%s0 + $0x2c0] sm:$0xff]
  %v103 = vld [vmem:[%s0 + $0x2c8] sm:$0xff]
  %v104 = vld [vmem:[%s0 + $0x2d0] sm:$0xff]
  %v105 = vld [vmem:[%s0 + $0x2d8] sm:$0xff]
  %v106 = vld [vmem:[%s0 + $0x2e0] sm:$0xff]
  %v107 = vld [vmem:[%s0 + $0x2e8] sm:$0xff]
  %v108 = vld [vmem:[%s0 + $0x2f0] sm:$0xff]
  %v109 = vld [vmem:[%s0 + $0x2f8] sm:$0xff]
  %v110 = vpack.c.bf16 %v20, %v14
  %v111 = vpack.c.bf16 %v21, %v15
  %v112 = vpack.c.bf16 %v22, %v16
  %v113 = vpack.c.bf16 %v23, %v17
  %v114 = vpack.c.bf16 %v24, %v18
  %v115 = vpack.c.bf16 %v25, %v19
  %v116 = vpack.c.bf16 %v32, %v26
  %v117 = vpack.c.bf16 %v33, %v27
  %v118 = vpack.c.bf16 %v34, %v28
  %v119 = vpack.c.bf16 %v35, %v29
  %v120 = vpack.c.bf16 %v36, %v30
  %v121 = vpack.c.bf16 %v37, %v31
  %v122 = vpack.c.bf16 %v44, %v38
  %v123 = vpack.c.bf16 %v45, %v39
  %v124 = vpack.c.bf16 %v46, %v40
  %v125 = vpack.c.bf16 %v47, %v41
  %v126 = vpack.c.bf16 %v48, %v42
  %v127 = vpack.c.bf16 %v49, %v43
  %v128 = vpack.c.bf16 %v56, %v50
  %v129 = vpack.c.bf16 %v57, %v51
  %v130 = vpack.c.bf16 %v58, %v52
  %v131 = vpack.c.bf16 %v59, %v53
  %v132 = vpack.c.bf16 %v60, %v54
  %v133 = vpack.c.bf16 %v61, %v55
  %v134 = vpack.c.bf16 %v68, %v62
  %v135 = vpack.c.bf16 %v69, %v63
  %v136 = vpack.c.bf16 %v70, %v64
  %v137 = vpack.c.bf16 %v71, %v65
  %v138 = vpack.c.bf16 %v72, %v66
  %v139 = vpack.c.bf16 %v73, %v67
  %v140 = vpack.c.bf16 %v80, %v74
  %v141 = vpack.c.bf16 %v81, %v75
  %v142 = vpack.c.bf16 %v82, %v76
  %v143 = vpack.c.bf16 %v83, %v77
  %v144 = vpack.c.bf16 %v84, %v78
  %v145 = vpack.c.bf16 %v85, %v79
  %v146 = vpack.c.bf16 %v92, %v86
  %v147 = vpack.c.bf16 %v93, %v87
  %v148 = vpack.c.bf16 %v94, %v88
  %v149 = vpack.c.bf16 %v95, %v89
  %v150 = vpack.c.bf16 %v96, %v90
  %v151 = vpack.c.bf16 %v97, %v91
  %v152 = vpack.c.bf16 %v104, %v98
  %v153 = vpack.c.bf16 %v105, %v99
  %v154 = vpack.c.bf16 %v106, %v100
  %v155 = vpack.c.bf16 %v107, %v101
  %v156 = vpack.c.bf16 %v108, %v102
  %v157 = vpack.c.bf16 %v109, %v103
  %v158 = vld [vmem:[%s1] sm:$0xff]
  %v159 = vld [vmem:[%s1 + $0x8] sm:$0xff]
  %v160 = vld [vmem:[%s1 + $0x10] sm:$0xff]
  %v161 = vld [vmem:[%s1 + $0x18] sm:$0xff]
  %v162 = vld [vmem:[%s1 + $0x20] sm:$0xff]
  %v163 = vld [vmem:[%s1 + $0x28] sm:$0xff]
  %v164 = vld [vmem:[%s1 + $0x30] sm:$0xff]
  %v165 = vld [vmem:[%s1 + $0x38] sm:$0xff]
  %v166 = vld [vmem:[%s1 + $0x40] sm:$0xff]
  %v167 = vld [vmem:[%s1 + $0x48] sm:$0xff]
  %v168 = vld [vmem:[%s1 + $0x50] sm:$0xff]
  %v169 = vld [vmem:[%s1 + $0x58] sm:$0xff]
  %v170 = vld [vmem:[%s1 + $0x60] sm:$0xff]
  %v171 = vld [vmem:[%s1 + $0x68] sm:$0xff]
  %v172 = vld [vmem:[%s1 + $0x70] sm:$0xff]
  %v173 = vld [vmem:[%s1 + $0x78] sm:$0xff]
  %v174 = vld [vmem:[%s1 + $0x80] sm:$0xff]
  %v175 = vld [vmem:[%s1 + $0x88] sm:$0xff]
  %v176 = vld [vmem:[%s1 + $0x90] sm:$0xff]
  %v177 = vld [vmem:[%s1 + $0x98] sm:$0xff]
  %v178 = vld [vmem:[%s1 + $0xa0] sm:$0xff]
  %v179 = vld [vmem:[%s1 + $0xa8] sm:$0xff]
  %v180 = vld [vmem:[%s1 + $0xb0] sm:$0xff]
  %v181 = vld [vmem:[%s1 + $0xb8] sm:$0xff]
  %v182 = vld [vmem:[%s1 + $0xc0] sm:$0xff]
  %v183 = vld [vmem:[%s1 + $0xc8] sm:$0xff]
  %v184 = vld [vmem:[%s1 + $0xd0] sm:$0xff]
  %v185 = vld [vmem:[%s1 + $0xd8] sm:$0xff]
  %v186 = vld [vmem:[%s1 + $0xe0] sm:$0xff]
  %v187 = vld [vmem:[%s1 + $0xe8] sm:$0xff]
  %v188 = vld [vmem:[%s1 + $0xf0] sm:$0xff]
  %v189 = vld [vmem:[%s1 + $0xf8] sm:$0xff]
  %v190 = vld [vmem:[%s1 + $0x100] sm:$0xff]
  %v191 = vld [vmem:[%s1 + $0x108] sm:$0xff]
  %v192 = vld [vmem:[%s1 + $0x110] sm:$0xff]
  %v193 = vld [vmem:[%s1 + $0x118] sm:$0xff]
  %v194 = vld [vmem:[%s1 + $0x120] sm:$0xff]
  %v195 = vld [vmem:[%s1 + $0x128] sm:$0xff]
  %v196 = vld [vmem:[%s1 + $0x130] sm:$0xff]
  %v197 = vld [vmem:[%s1 + $0x138] sm:$0xff]
  %v198 = vld [vmem:[%s1 + $0x140] sm:$0xff]
  %v199 = vld [vmem:[%s1 + $0x148] sm:$0xff]
  %v200 = vld [vmem:[%s1 + $0x150] sm:$0xff]
  %v201 = vld [vmem:[%s1 + $0x158] sm:$0xff]
  %v202 = vld [vmem:[%s1 + $0x160] sm:$0xff]
  %v203 = vld [vmem:[%s1 + $0x168] sm:$0xff]
  %v204 = vld [vmem:[%s1 + $0x170] sm:$0xff]
  %v205 = vld [vmem:[%s1 + $0x178] sm:$0xff]
  %v206 = vld [vmem:[%s1 + $0x180] sm:$0xff]
  %v207 = vld [vmem:[%s1 + $0x188] sm:$0xff]
  %v208 = vld [vmem:[%s1 + $0x190] sm:$0xff]
  %v209 = vld [vmem:[%s1 + $0x198] sm:$0xff]
  %v210 = vld [vmem:[%s1 + $0x1a0] sm:$0xff]
  %v211 = vld [vmem:[%s1 + $0x1a8] sm:$0xff]
  %v212 = vld [vmem:[%s1 + $0x1b0] sm:$0xff]
  %v213 = vld [vmem:[%s1 + $0x1b8] sm:$0xff]
  %v214 = vld [vmem:[%s1 + $0x1c0] sm:$0xff]
  %v215 = vld [vmem:[%s1 + $0x1c8] sm:$0xff]
  %v216 = vld [vmem:[%s1 + $0x1d0] sm:$0xff]
  %v217 = vld [vmem:[%s1 + $0x1d8] sm:$0xff]
  %v218 = vld [vmem:[%s1 + $0x1e0] sm:$0xff]
  %v219 = vld [vmem:[%s1 + $0x1e8] sm:$0xff]
  %v220 = vld [vmem:[%s1 + $0x1f0] sm:$0xff]
  %v221 = vld [vmem:[%s1 + $0x1f8] sm:$0xff]
  %v222 = vld [vmem:[%s1 + $0x200] sm:$0xff]
  %v223 = vld [vmem:[%s1 + $0x208] sm:$0xff]
  %v224 = vld [vmem:[%s1 + $0x210] sm:$0xff]
  %v225 = vld [vmem:[%s1 + $0x218] sm:$0xff]
  %v226 = vld [vmem:[%s1 + $0x220] sm:$0xff]
  %v227 = vld [vmem:[%s1 + $0x228] sm:$0xff]
  %v228 = vld [vmem:[%s1 + $0x230] sm:$0xff]
  %v229 = vld [vmem:[%s1 + $0x238] sm:$0xff]
  %v230 = vld [vmem:[%s1 + $0x240] sm:$0xff]
  %v231 = vld [vmem:[%s1 + $0x248] sm:$0xff]
  %v232 = vld [vmem:[%s1 + $0x250] sm:$0xff]
  %v233 = vld [vmem:[%s1 + $0x258] sm:$0xff]
  %v234 = vld [vmem:[%s1 + $0x260] sm:$0xff]
  %v235 = vld [vmem:[%s1 + $0x268] sm:$0xff]
  %v236 = vld [vmem:[%s1 + $0x270] sm:$0xff]
  %v237 = vld [vmem:[%s1 + $0x278] sm:$0xff]
  %v238 = vld [vmem:[%s1 + $0x280] sm:$0xff]
  %v239 = vld [vmem:[%s1 + $0x288] sm:$0xff]
  %v240 = vld [vmem:[%s1 + $0x290] sm:$0xff]
  %v241 = vld [vmem:[%s1 + $0x298] sm:$0xff]
  %v242 = vld [vmem:[%s1 + $0x2a0] sm:$0xff]
  %v243 = vld [vmem:[%s1 + $0x2a8] sm:$0xff]
  %v244 = vld [vmem:[%s1 + $0x2b0] sm:$0xff]
  %v245 = vld [vmem:[%s1 + $0x2b8] sm:$0xff]
  %v246 = vld [vmem:[%s1 + $0x2c0] sm:$0xff]
  %v247 = vld [vmem:[%s1 + $0x2c8] sm:$0xff]
  %v248 = vld [vmem:[%s1 + $0x2d0] sm:$0xff]
  %v249 = vld [vmem:[%s1 + $0x2d8] sm:$0xff]
  %v250 = vld [vmem:[%s1 + $0x2e0] sm:$0xff]
  %v251 = vld [vmem:[%s1 + $0x2e8] sm:$0xff]
  %v252 = vld [vmem:[%s1 + $0x2f0] sm:$0xff]
  %v253 = vld [vmem:[%s1 + $0x2f8] sm:$0xff]
  %v254 = vld [vmem:[%s2] sm:$0x3]
  %v256 = vlaneseq
  %v257 = vshrl.u32 %v256, 7
  %v258 = vsub.s32 0, %v257
  %v259 = vrot.slane %v254, %v258
  %v260 = vlaneseq
  %v261 = vshrl.u32 %v260, 7
  %v262 = vsub.s32 1, %v261
  %v263 = vrot.slane %v254, %v262
  %v362 = vunpack.c.l.b16 %v158
  %v363 = vunpack.c.h.b16 %v158
  %v364 = vunpack.c.l.b16 %v159
  %v365 = vunpack.c.h.b16 %v159
  %v366 = vunpack.c.l.b16 %v160
  %v367 = vunpack.c.h.b16 %v160
  %v368 = vunpack.c.l.b16 %v161
  %v369 = vunpack.c.h.b16 %v161
  %v370 = vunpack.c.l.b16 %v162
  %v371 = vunpack.c.h.b16 %v162
  %v372 = vunpack.c.l.b16 %v163
  %v373 = vunpack.c.h.b16 %v163
  %v374 = vunpack.c.l.b16 %v164
  %v375 = vunpack.c.h.b16 %v164
  %v376 = vunpack.c.l.b16 %v165
  %v377 = vunpack.c.h.b16 %v165
  %v378 = vunpack.c.l.b16 %v166
  %v379 = vunpack.c.h.b16 %v166
  %v380 = vunpack.c.l.b16 %v167
  %v381 = vunpack.c.h.b16 %v167
  %v382 = vunpack.c.l.b16 %v168
  %v383 = vunpack.c.h.b16 %v168
  %v384 = vunpack.c.l.b16 %v169
  %v385 = vunpack.c.h.b16 %v169
  %v386 = vunpack.c.l.b16 %v170
  %v387 = vunpack.c.h.b16 %v170
  %v388 = vunpack.c.l.b16 %v171
  %v389 = vunpack.c.h.b16 %v171
  %v390 = vunpack.c.l.b16 %v172
  %v391 = vunpack.c.h.b16 %v172
  %v392 = vunpack.c.l.b16 %v173
  %v393 = vunpack.c.h.b16 %v173
  %v394 = vunpack.c.l.b16 %v174
  %v395 = vunpack.c.h.b16 %v174
  %v396 = vunpack.c.l.b16 %v175
  %v397 = vunpack.c.h.b16 %v175
  %v398 = vunpack.c.l.b16 %v176
  %v399 = vunpack.c.h.b16 %v176
  %v400 = vunpack.c.l.b16 %v177
  %v401 = vunpack.c.h.b16 %v177
  %v402 = vunpack.c.l.b16 %v178
  %v403 = vunpack.c.h.b16 %v178
  %v404 = vunpack.c.l.b16 %v179
  %v405 = vunpack.c.h.b16 %v179
  %v406 = vunpack.c.l.b16 %v180
  %v407 = vunpack.c.h.b16 %v180
  %v408 = vunpack.c.l.b16 %v181
  %v409 = vunpack.c.h.b16 %v181
  %v410 = vunpack.c.l.b16 %v182
  %v411 = vunpack.c.h.b16 %v182
  %v412 = vunpack.c.l.b16 %v183
  %v413 = vunpack.c.h.b16 %v183
  %v414 = vunpack.c.l.b16 %v184
  %v415 = vunpack.c.h.b16 %v184
  %v416 = vunpack.c.l.b16 %v185
  %v417 = vunpack.c.h.b16 %v185
  %v418 = vunpack.c.l.b16 %v186
  %v419 = vunpack.c.h.b16 %v186
  %v420 = vunpack.c.l.b16 %v187
  %v421 = vunpack.c.h.b16 %v187
  %v422 = vunpack.c.l.b16 %v188
  %v423 = vunpack.c.h.b16 %v188
  %v424 = vunpack.c.l.b16 %v189
  %v425 = vunpack.c.h.b16 %v189
  %v426 = vunpack.c.l.b16 %v190
  %v427 = vunpack.c.h.b16 %v190
  %v428 = vunpack.c.l.b16 %v191
  %v429 = vunpack.c.h.b16 %v191
  %v430 = vunpack.c.l.b16 %v192
  %v431 = vunpack.c.h.b16 %v192
  %v432 = vunpack.c.l.b16 %v193
  %v433 = vunpack.c.h.b16 %v193
  %v434 = vunpack.c.l.b16 %v194
  %v435 = vunpack.c.h.b16 %v194
  %v436 = vunpack.c.l.b16 %v195
  %v437 = vunpack.c.h.b16 %v195
  %v438 = vunpack.c.l.b16 %v196
  %v439 = vunpack.c.h.b16 %v196
  %v440 = vunpack.c.l.b16 %v197
  %v441 = vunpack.c.h.b16 %v197
  %v442 = vunpack.c.l.b16 %v198
  %v443 = vunpack.c.h.b16 %v198
  %v444 = vunpack.c.l.b16 %v199
  %v445 = vunpack.c.h.b16 %v199
  %v446 = vunpack.c.l.b16 %v200
  %v447 = vunpack.c.h.b16 %v200
  %v448 = vunpack.c.l.b16 %v201
  %v449 = vunpack.c.h.b16 %v201
  %v450 = vunpack.c.l.b16 %v202
  %v451 = vunpack.c.h.b16 %v202
  %v452 = vunpack.c.l.b16 %v203
  %v453 = vunpack.c.h.b16 %v203
  %v454 = vunpack.c.l.b16 %v204
  %v455 = vunpack.c.h.b16 %v204
  %v456 = vunpack.c.l.b16 %v205
  %v457 = vunpack.c.h.b16 %v205
  %v458 = vunpack.c.l.b16 %v206
  %v459 = vunpack.c.h.b16 %v206
  %v460 = vunpack.c.l.b16 %v207
  %v461 = vunpack.c.h.b16 %v207
  %v462 = vunpack.c.l.b16 %v208
  %v463 = vunpack.c.h.b16 %v208
  %v464 = vunpack.c.l.b16 %v209
  %v465 = vunpack.c.h.b16 %v209
  %v466 = vunpack.c.l.b16 %v210
  %v467 = vunpack.c.h.b16 %v210
  %v468 = vunpack.c.l.b16 %v211
  %v469 = vunpack.c.h.b16 %v211
  %v470 = vunpack.c.l.b16 %v212
  %v471 = vunpack.c.h.b16 %v212
  %v472 = vunpack.c.l.b16 %v213
  %v473 = vunpack.c.h.b16 %v213
  %v474 = vunpack.c.l.b16 %v214
  %v475 = vunpack.c.h.b16 %v214
  %v476 = vunpack.c.l.b16 %v215
  %v477 = vunpack.c.h.b16 %v215
  %v478 = vunpack.c.l.b16 %v216
  %v479 = vunpack.c.h.b16 %v216
  %v480 = vunpack.c.l.b16 %v217
  %v481 = vunpack.c.h.b16 %v217
  %v482 = vunpack.c.l.b16 %v218
  %v483 = vunpack.c.h.b16 %v218
  %v484 = vunpack.c.l.b16 %v219
  %v485 = vunpack.c.h.b16 %v219
  %v486 = vunpack.c.l.b16 %v220
  %v487 = vunpack.c.h.b16 %v220
  %v488 = vunpack.c.l.b16 %v221
  %v489 = vunpack.c.h.b16 %v221
  %v490 = vunpack.c.l.b16 %v222
  %v491 = vunpack.c.h.b16 %v222
  %v492 = vunpack.c.l.b16 %v223
  %v493 = vunpack.c.h.b16 %v223
  %v494 = vunpack.c.l.b16 %v224
  %v495 = vunpack.c.h.b16 %v224
  %v496 = vunpack.c.l.b16 %v225
  %v497 = vunpack.c.h.b16 %v225
  %v498 = vunpack.c.l.b16 %v226
  %v499 = vunpack.c.h.b16 %v226
  %v500 = vunpack.c.l.b16 %v227
  %v501 = vunpack.c.h.b16 %v227
  %v502 = vunpack.c.l.b16 %v228
  %v503 = vunpack.c.h.b16 %v228
  %v504 = vunpack.c.l.b16 %v229
  %v505 = vunpack.c.h.b16 %v229
  %v506 = vunpack.c.l.b16 %v230
  %v507 = vunpack.c.h.b16 %v230
  %v508 = vunpack.c.l.b16 %v231
  %v509 = vunpack.c.h.b16 %v231
  %v510 = vunpack.c.l.b16 %v232
  %v511 = vunpack.c.h.b16 %v232
  %v512 = vunpack.c.l.b16 %v233
  %v513 = vunpack.c.h.b16 %v233
  %v514 = vunpack.c.l.b16 %v234
  %v515 = vunpack.c.h.b16 %v234
  %v516 = vunpack.c.l.b16 %v235
  %v517 = vunpack.c.h.b16 %v235
  %v518 = vunpack.c.l.b16 %v236
  %v519 = vunpack.c.h.b16 %v236
  %v520 = vunpack.c.l.b16 %v237
  %v521 = vunpack.c.h.b16 %v237
  %v522 = vunpack.c.l.b16 %v238
  %v523 = vunpack.c.h.b16 %v238
  %v524 = vunpack.c.l.b16 %v239
  %v525 = vunpack.c.h.b16 %v239
  %v526 = vunpack.c.l.b16 %v240
  %v527 = vunpack.c.h.b16 %v240
  %v528 = vunpack.c.l.b16 %v241
  %v529 = vunpack.c.h.b16 %v241
  %v530 = vunpack.c.l.b16 %v242
  %v531 = vunpack.c.h.b16 %v242
  %v532 = vunpack.c.l.b16 %v243
  %v533 = vunpack.c.h.b16 %v243
  %v534 = vunpack.c.l.b16 %v244
  %v535 = vunpack.c.h.b16 %v244
  %v536 = vunpack.c.l.b16 %v245
  %v537 = vunpack.c.h.b16 %v245
  %v538 = vunpack.c.l.b16 %v246
  %v539 = vunpack.c.h.b16 %v246
  %v540 = vunpack.c.l.b16 %v247
  %v541 = vunpack.c.h.b16 %v247
  %v542 = vunpack.c.l.b16 %v248
  %v543 = vunpack.c.h.b16 %v248
  %v544 = vunpack.c.l.b16 %v249
  %v545 = vunpack.c.h.b16 %v249
  %v546 = vunpack.c.l.b16 %v250
  %v547 = vunpack.c.h.b16 %v250
  %v548 = vunpack.c.l.b16 %v251
  %v549 = vunpack.c.h.b16 %v251
  %v550 = vunpack.c.l.b16 %v252
  %v551 = vunpack.c.h.b16 %v252
  %v552 = vunpack.c.l.b16 %v253
  %v553 = vunpack.c.h.b16 %v253
  %v554 = vpack.c.b16 %v364, %v362
  %v555 = vpack.c.b16 %v365, %v363
  %v556 = vpack.c.b16 %v368, %v366
  %v557 = vpack.c.b16 %v369, %v367
  %v558 = vpack.c.b16 %v372, %v370
  %v559 = vpack.c.b16 %v373, %v371
  %v560 = vpack.c.b16 %v376, %v374
  %v561 = vpack.c.b16 %v377, %v375
  %v562 = vpack.c.b16 %v380, %v378
  %v563 = vpack.c.b16 %v381, %v379
  %v564 = vpack.c.b16 %v384, %v382
  %v565 = vpack.c.b16 %v385, %v383
  %v566 = vpack.c.b16 %v388, %v386
  %v567 = vpack.c.b16 %v389, %v387
  %v568 = vpack.c.b16 %v392, %v390
  %v569 = vpack.c.b16 %v393, %v391
  %v570 = vpack.c.b16 %v396, %v394
  %v571 = vpack.c.b16 %v397, %v395
  %v572 = vpack.c.b16 %v400, %v398
  %v573 = vpack.c.b16 %v401, %v399
  %v574 = vpack.c.b16 %v404, %v402
  %v575 = vpack.c.b16 %v405, %v403
  %v576 = vpack.c.b16 %v408, %v406
  %v577 = vpack.c.b16 %v409, %v407
  %v578 = vpack.c.b16 %v412, %v410
  %v579 = vpack.c.b16 %v413, %v411
  %v580 = vpack.c.b16 %v416, %v414
  %v581 = vpack.c.b16 %v417, %v415
  %v582 = vpack.c.b16 %v420, %v418
  %v583 = vpack.c.b16 %v421, %v419
  %v584 = vpack.c.b16 %v424, %v422
  %v585 = vpack.c.b16 %v425, %v423
  %v586 = vpack.c.b16 %v428, %v426
  %v587 = vpack.c.b16 %v429, %v427
  %v588 = vpack.c.b16 %v432, %v430
  %v589 = vpack.c.b16 %v433, %v431
  %v590 = vpack.c.b16 %v436, %v434
  %v591 = vpack.c.b16 %v437, %v435
  %v592 = vpack.c.b16 %v440, %v438
  %v593 = vpack.c.b16 %v441, %v439
  %v594 = vpack.c.b16 %v444, %v442
  %v595 = vpack.c.b16 %v445, %v443
  %v596 = vpack.c.b16 %v448, %v446
  %v597 = vpack.c.b16 %v449, %v447
  %v598 = vpack.c.b16 %v452, %v450
  %v599 = vpack.c.b16 %v453, %v451
  %v600 = vpack.c.b16 %v456, %v454
  %v601 = vpack.c.b16 %v457, %v455
  %v602 = vpack.c.b16 %v460, %v458
  %v603 = vpack.c.b16 %v461, %v459
  %v604 = vpack.c.b16 %v464, %v462
  %v605 = vpack.c.b16 %v465, %v463
  %v606 = vpack.c.b16 %v468, %v466
  %v607 = vpack.c.b16 %v469, %v467
  %v608 = vpack.c.b16 %v472, %v470
  %v609 = vpack.c.b16 %v473, %v471
  %v610 = vpack.c.b16 %v476, %v474
  %v611 = vpack.c.b16 %v477, %v475
  %v612 = vpack.c.b16 %v480, %v478
  %v613 = vpack.c.b16 %v481, %v479
  %v614 = vpack.c.b16 %v484, %v482
  %v615 = vpack.c.b16 %v485, %v483
  %v616 = vpack.c.b16 %v488, %v486
  %v617 = vpack.c.b16 %v489, %v487
  %v618 = vpack.c.b16 %v492, %v490
  %v619 = vpack.c.b16 %v493, %v491
  %v620 = vpack.c.b16 %v496, %v494
  %v621 = vpack.c.b16 %v497, %v495
  %v622 = vpack.c.b16 %v500, %v498
  %v623 = vpack.c.b16 %v501, %v499
  %v624 = vpack.c.b16 %v504, %v502
  %v625 = vpack.c.b16 %v505, %v503
  %v626 = vpack.c.b16 %v508, %v506
  %v627 = vpack.c.b16 %v509, %v507
  %v628 = vpack.c.b16 %v512, %v510
  %v629 = vpack.c.b16 %v513, %v511
  %v630 = vpack.c.b16 %v516, %v514
  %v631 = vpack.c.b16 %v517, %v515
  %v632 = vpack.c.b16 %v520, %v518
  %v633 = vpack.c.b16 %v521, %v519
  %v634 = vpack.c.b16 %v524, %v522
  %v635 = vpack.c.b16 %v525, %v523
  %v636 = vpack.c.b16 %v528, %v526
  %v637 = vpack.c.b16 %v529, %v527
  %v638 = vpack.c.b16 %v532, %v530
  %v639 = vpack.c.b16 %v533, %v531
  %v640 = vpack.c.b16 %v536, %v534
  %v641 = vpack.c.b16 %v537, %v535
  %v642 = vpack.c.b16 %v540, %v538
  %v643 = vpack.c.b16 %v541, %v539
  %v644 = vpack.c.b16 %v544, %v542
  %v645 = vpack.c.b16 %v545, %v543
  %v646 = vpack.c.b16 %v548, %v546
  %v647 = vpack.c.b16 %v549, %v547
  %v648 = vpack.c.b16 %v552, %v550
  %v649 = vpack.c.b16 %v553, %v551
  %746 = vmatprep.subr.bf16.mxu0 %v555
  %747 = vmatpush1.bf16.msra.mxu0 %v554
  %748 = vmatprep.subr.bf16.mxu0 %v557
  %749 = vmatpush1.bf16.msra.mxu0 %v556
  %750 = vmatprep.subr.bf16.mxu0 %v559
  %751 = vmatpush1.bf16.msra.mxu0 %v558
  %752 = vmatprep.subr.bf16.mxu0 %v561
  %753 = vmatpush1.bf16.msra.mxu0 %v560
  %754 = vmatprep.subr.bf16.mxu0 %v563
  %755 = vmatpush1.bf16.msra.mxu0 %v562
  %756 = vmatprep.subr.bf16.mxu0 %v565
  %757 = vmatpush1.bf16.msra.mxu0 %v564
  %758 = vmatprep.subr.bf16.mxu0 %v567
  %759 = vmatpush1.bf16.msra.mxu0 %v566
  %760 = vmatprep.subr.bf16.mxu0 %v569
  %761 = vmatpush1.bf16.msra.mxu0 %v568
  %762 = vmatprep.subr.bf16.mxu0 %v571
  %763 = vmatpush1.bf16.msra.mxu0 %v570
  %764 = vmatprep.subr.bf16.mxu0 %v573
  %765 = vmatpush1.bf16.msra.mxu0 %v572
  %766 = vmatprep.subr.bf16.mxu0 %v575
  %767 = vmatpush1.bf16.msra.mxu0 %v574
  %768 = vmatprep.subr.bf16.mxu0 %v577
  %769 = vmatpush1.bf16.msra.mxu0 %v576
  %770 = vmatprep.subr.bf16.mxu0 %v579
  %771 = vmatpush1.bf16.msra.mxu0 %v578
  %772 = vmatprep.subr.bf16.mxu0 %v581
  %773 = vmatpush1.bf16.msra.mxu0 %v580
  %774 = vmatprep.subr.bf16.mxu0 %v583
  %775 = vmatpush1.bf16.msra.mxu0 %v582
  %776 = vmatprep.subr.bf16.mxu0 %v585
  %777 = vmatpush1.bf16.msra.mxu0 %v584
  %778 = vmatprep.mubr.bf16.mxu0 %v111
  %779 = vmatmul.mubr.bf16.gmra.mrb[0].mxu0 %v110
  %v780 = vpop.f32.mrb[0].mxu0
  %v781 = vadd.f32 %v259, %v780
  %v782 = vpop.f32.mrb[0].mxu0
  %v783 = vadd.f32 %v263, %v782
  %v784 = vpop.f32.mrb[0].mxu0
  %v785 = vadd.f32 %v259, %v784
  %v786 = vpop.f32.mrb[0].mxu0
  %v787 = vadd.f32 %v263, %v786
  %788 = vmatprep.mubr.bf16.mxu0 %v117
  %789 = vmatmul.mubr.bf16.gmra.mrb[0].mxu0 %v116
  %v790 = vpop.f32.mrb[0].mxu0
  %v791 = vadd.f32 %v259, %v790
  %v792 = vpop.f32.mrb[0].mxu0
  %v793 = vadd.f32 %v263, %v792
  %v794 = vpop.f32.mrb[0].mxu0
  %v795 = vadd.f32 %v259, %v794
  %v796 = vpop.f32.mrb[0].mxu0
  %v797 = vadd.f32 %v263, %v796
  %798 = vmatprep.mubr.bf16.mxu0 %v123
  %799 = vmatmul.mubr.bf16.gmra.mrb[0].mxu0 %v122
  %v800 = vpop.f32.mrb[0].mxu0
  %v801 = vadd.f32 %v259, %v800
  %v802 = vpop.f32.mrb[0].mxu0
  %v803 = vadd.f32 %v263, %v802
  %v804 = vpop.f32.mrb[0].mxu0
  %v805 = vadd.f32 %v259, %v804
  %v806 = vpop.f32.mrb[0].mxu0
  %v807 = vadd.f32 %v263, %v806
  %808 = vmatprep.mubr.bf16.mxu0 %v129
  %809 = vmatmul.mubr.bf16.gmra.mrb[0].mxu0 %v128
  %v810 = vpop.f32.mrb[0].mxu0
  %v811 = vadd.f32 %v259, %v810
  %v812 = vpop.f32.mrb[0].mxu0
  %v813 = vadd.f32 %v263, %v812
  %v814 = vpop.f32.mrb[0].mxu0
  %v815 = vadd.f32 %v259, %v814
  %v816 = vpop.f32.mrb[0].mxu0
  %v817 = vadd.f32 %v263, %v816
  %818 = vmatprep.mubr.bf16.mxu0 %v135
  %819 = vmatmul.mubr.bf16.gmra.mrb[0].mxu0 %v134
  %v820 = vpop.f32.mrb[0].mxu0
  %v821 = vadd.f32 %v259, %v820
  %v822 = vpop.f32.mrb[0].mxu0
  %v823 = vadd.f32 %v263, %v822
  %v824 = vpop.f32.mrb[0].mxu0
  %v825 = vadd.f32 %v259, %v824
  %v826 = vpop.f32.mrb[0].mxu0
  %v827 = vadd.f32 %v263, %v826
  %828 = vmatprep.mubr.bf16.mxu0 %v141
  %829 = vmatmul.mubr.bf16.gmra.mrb[0].mxu0 %v140
  %v830 = vpop.f32.mrb[0].mxu0
  %v831 = vadd.f32 %v259, %v830
  %v832 = vpop.f32.mrb[0].mxu0
  %v833 = vadd.f32 %v263, %v832
  %v834 = vpop.f32.mrb[0].mxu0
  %v835 = vadd.f32 %v259, %v834
  %v836 = vpop.f32.mrb[0].mxu0
  %v837 = vadd.f32 %v263, %v836
  %838 = vmatprep.mubr.bf16.mxu0 %v147
  %839 = vmatmul.mubr.bf16.gmra.mrb[0].mxu0 %v146
  %v840 = vpop.f32.mrb[0].mxu0
  %v841 = vadd.f32 %v259, %v840
  %v842 = vpop.f32.mrb[0].mxu0
  %v843 = vadd.f32 %v263, %v842
  %v844 = vpop.f32.mrb[0].mxu0
  %v845 = vadd.f32 %v259, %v844
  %v846 = vpop.f32.mrb[0].mxu0
  %v847 = vadd.f32 %v263, %v846
  %848 = vmatprep.mubr.bf16.mxu0 %v153
  %849 = vmatmul.mubr.bf16.gmra.mrb[0].mxu0 %v152
  %v850 = vpop.f32.mrb[0].mxu0
  %v851 = vadd.f32 %v259, %v850
  %v852 = vpop.f32.mrb[0].mxu0
  %v853 = vadd.f32 %v263, %v852
  %v854 = vpop.f32.mrb[0].mxu0
  %v855 = vadd.f32 %v259, %v854
  %v856 = vpop.f32.mrb[0].mxu0
  %v857 = vadd.f32 %v263, %v856
  %858 = vdwg.mxu0
  %859 = vmatprep.subr.bf16.mxu0 %v587
  %860 = vmatpush1.bf16.msra.mxu0 %v586
  %861 = vmatprep.subr.bf16.mxu0 %v589
  %862 = vmatpush1.bf16.msra.mxu0 %v588
  %863 = vmatprep.subr.bf16.mxu0 %v591
  %864 = vmatpush1.bf16.msra.mxu0 %v590
  %865 = vmatprep.subr.bf16.mxu0 %v593
  %866 = vmatpush1.bf16.msra.mxu0 %v592
  %867 = vmatprep.subr.bf16.mxu0 %v595
  %868 = vmatpush1.bf16.msra.mxu0 %v594
  %869 = vmatprep.subr.bf16.mxu0 %v597
  %870 = vmatpush1.bf16.msra.mxu0 %v596
  %871 = vmatprep.subr.bf16.mxu0 %v599
  %872 = vmatpush1.bf16.msra.mxu0 %v598
  %873 = vmatprep.subr.bf16.mxu0 %v601
  %874 = vmatpush1.bf16.msra.mxu0 %v600
  %875 = vmatprep.subr.bf16.mxu0 %v603
  %876 = vmatpush1.bf16.msra.mxu0 %v602
  %877 = vmatprep.subr.bf16.mxu0 %v605
  %878 = vmatpush1.bf16.msra.mxu0 %v604
  %879 = vmatprep.subr.bf16.mxu0 %v607
  %880 = vmatpush1.bf16.msra.mxu0 %v606
  %881 = vmatprep.subr.bf16.mxu0 %v609
  %882 = vmatpush1.bf16.msra.mxu0 %v608
  %883 = vmatprep.subr.bf16.mxu0 %v611
  %884 = vmatpush1.bf16.msra.mxu0 %v610
  %885 = vmatprep.subr.bf16.mxu0 %v613
  %886 = vmatpush1.bf16.msra.mxu0 %v612
  %887 = vmatprep.subr.bf16.mxu0 %v615
  %888 = vmatpush1.bf16.msra.mxu0 %v614
  %889 = vmatprep.subr.bf16.mxu0 %v617
  %890 = vmatpush1.bf16.msra.mxu0 %v616
  %891 = vmatprep.mubr.bf16.mxu0 %v113
  %892 = vmatmul.mubr.bf16.gmra.mrb[0].mxu0 %v112
  %v893 = vpop.f32.mrb[0].mxu0
  %v894 = vadd.f32 %v781, %v893
  %v895 = vpop.f32.mrb[0].mxu0
  %v896 = vadd.f32 %v783, %v895
  %v897 = vpop.f32.mrb[0].mxu0
  %v898 = vadd.f32 %v785, %v897
  %v899 = vpop.f32.mrb[0].mxu0
  %v900 = vadd.f32 %v787, %v899
  %901 = vmatprep.mubr.bf16.mxu0 %v119
  %902 = vmatmul.mubr.bf16.gmra.mrb[0].mxu0 %v118
  %v903 = vpop.f32.mrb[0].mxu0
  %v904 = vadd.f32 %v791, %v903
  %v905 = vpop.f32.mrb[0].mxu0
  %v906 = vadd.f32 %v793, %v905
  %v907 = vpop.f32.mrb[0].mxu0
  %v908 = vadd.f32 %v795, %v907
  %v909 = vpop.f32.mrb[0].mxu0
  %v910 = vadd.f32 %v797, %v909
  %911 = vmatprep.mubr.bf16.mxu0 %v125
  %912 = vmatmul.mubr.bf16.gmra.mrb[0].mxu0 %v124
  %v913 = vpop.f32.mrb[0].mxu0
  %v914 = vadd.f32 %v801, %v913
  %v915 = vpop.f32.mrb[0].mxu0
  %v916 = vadd.f32 %v803, %v915
  %v917 = vpop.f32.mrb[0].mxu0
  %v918 = vadd.f32 %v805, %v917
  %v919 = vpop.f32.mrb[0].mxu0
  %v920 = vadd.f32 %v807, %v919
  %921 = vmatprep.mubr.bf16.mxu0 %v131
  %922 = vmatmul.mubr.bf16.gmra.mrb[0].mxu0 %v130
  %v923 = vpop.f32.mrb[0].mxu0
  %v924 = vadd.f32 %v811, %v923
  %v925 = vpop.f32.mrb[0].mxu0
  %v926 = vadd.f32 %v813, %v925
  %v927 = vpop.f32.mrb[0].mxu0
  %v928 = vadd.f32 %v815, %v927
  %v929 = vpop.f32.mrb[0].mxu0
  %v930 = vadd.f32 %v817, %v929
  %931 = vmatprep.mubr.bf16.mxu0 %v137
  %932 = vmatmul.mubr.bf16.gmra.mrb[0].mxu0 %v136
  %v933 = vpop.f32.mrb[0].mxu0
  %v934 = vadd.f32 %v821, %v933
  %v935 = vpop.f32.mrb[0].mxu0
  %v936 = vadd.f32 %v823, %v935
  %v937 = vpop.f32.mrb[0].mxu0
  %v938 = vadd.f32 %v825, %v937
  %v939 = vpop.f32.mrb[0].mxu0
  %v940 = vadd.f32 %v827, %v939
  %941 = vmatprep.mubr.bf16.mxu0 %v143
  %942 = vmatmul.mubr.bf16.gmra.mrb[0].mxu0 %v142
  %v943 = vpop.f32.mrb[0].mxu0
  %v944 = vadd.f32 %v831, %v943
  %v945 = vpop.f32.mrb[0].mxu0
  %v946 = vadd.f32 %v833, %v945
  %v947 = vpop.f32.mrb[0].mxu0
  %v948 = vadd.f32 %v835, %v947
  %v949 = vpop.f32.mrb[0].mxu0
  %v950 = vadd.f32 %v837, %v949
  %951 = vmatprep.mubr.bf16.mxu0 %v149
  %952 = vmatmul.mubr.bf16.gmra.mrb[0].mxu0 %v148
  %v953 = vpop.f32.mrb[0].mxu0
  %v954 = vadd.f32 %v841, %v953
  %v955 = vpop.f32.mrb[0].mxu0
  %v956 = vadd.f32 %v843, %v955
  %v957 = vpop.f32.mrb[0].mxu0
  %v958 = vadd.f32 %v845, %v957
  %v959 = vpop.f32.mrb[0].mxu0
  %v960 = vadd.f32 %v847, %v959
  %961 = vmatprep.mubr.bf16.mxu0 %v155
  %962 = vmatmul.mubr.bf16.gmra.mrb[0].mxu0 %v154
  %v963 = vpop.f32.mrb[0].mxu0
  %v964 = vadd.f32 %v851, %v963
  %v965 = vpop.f32.mrb[0].mxu0
  %v966 = vadd.f32 %v853, %v965
  %v967 = vpop.f32.mrb[0].mxu0
  %v968 = vadd.f32 %v855, %v967
  %v969 = vpop.f32.mrb[0].mxu0
  %v970 = vadd.f32 %v857, %v969
  %971 = vdwg.mxu0
  %972 = vmatprep.subr.bf16.mxu0 %v619
  %973 = vmatpush1.bf16.msra.mxu0 %v618
  %974 = vmatprep.subr.bf16.mxu0 %v621
  %975 = vmatpush1.bf16.msra.mxu0 %v620
  %976 = vmatprep.subr.bf16.mxu0 %v623
  %977 = vmatpush1.bf16.msra.mxu0 %v622
  %978 = vmatprep.subr.bf16.mxu0 %v625
  %979 = vmatpush1.bf16.msra.mxu0 %v624
  %980 = vmatprep.subr.bf16.mxu0 %v627
  %981 = vmatpush1.bf16.msra.mxu0 %v626
  %982 = vmatprep.subr.bf16.mxu0 %v629
  %983 = vmatpush1.bf16.msra.mxu0 %v628
  %984 = vmatprep.subr.bf16.mxu0 %v631
  %985 = vmatpush1.bf16.msra.mxu0 %v630
  %986 = vmatprep.subr.bf16.mxu0 %v633
  %987 = vmatpush1.bf16.msra.mxu0 %v632
  %988 = vmatprep.subr.bf16.mxu0 %v635
  %989 = vmatpush1.bf16.msra.mxu0 %v634
  %990 = vmatprep.subr.bf16.mxu0 %v637
  %991 = vmatpush1.bf16.msra.mxu0 %v636
  %992 = vmatprep.subr.bf16.mxu0 %v639
  %993 = vmatpush1.bf16.msra.mxu0 %v638
  %994 = vmatprep.subr.bf16.mxu0 %v641
  %995 = vmatpush1.bf16.msra.mxu0 %v640
  %996 = vmatprep.subr.bf16.mxu0 %v643
  %997 = vmatpush1.bf16.msra.mxu0 %v642
  %998 = vmatprep.subr.bf16.mxu0 %v645
  %999 = vmatpush1.bf16.msra.mxu0 %v644
  %1000 = vmatprep.subr.bf16.mxu0 %v647
  %1001 = vmatpush1.bf16.msra.mxu0 %v646
  %1002 = vmatprep.subr.bf16.mxu0 %v649
  %1003 = vmatpush1.bf16.msra.mxu0 %v648
  %1004 = vmatprep.mubr.bf16.mxu0 %v115
  %1005 = vmatmul.mubr.bf16.gmra.mrb[0].mxu0 %v114
  %v1006 = vpop.f32.mrb[0].mxu0
  %v1007 = vadd.f32 %v894, %v1006
  %v1008 = vpop.f32.mrb[0].mxu0
  %v1009 = vadd.f32 %v896, %v1008
  %v1010 = vpop.f32.mrb[0].mxu0
  %v1011 = vadd.f32 %v898, %v1010
  %v1012 = vpop.f32.mrb[0].mxu0
  %v1013 = vadd.f32 %v900, %v1012
  %1014 = vmatprep.mubr.bf16.mxu0 %v121
  %1015 = vmatmul.mubr.bf16.gmra.mrb[0].mxu0 %v120
  %v1016 = vpop.f32.mrb[0].mxu0
  %v1017 = vadd.f32 %v904, %v1016
  %v1018 = vpop.f32.mrb[0].mxu0
  %v1019 = vadd.f32 %v906, %v1018
  %v1020 = vpop.f32.mrb[0].mxu0
  %v1021 = vadd.f32 %v908, %v1020
  %v1022 = vpop.f32.mrb[0].mxu0
  %v1023 = vadd.f32 %v910, %v1022
  %1024 = vmatprep.mubr.bf16.mxu0 %v127
  %1025 = vmatmul.mubr.bf16.gmra.mrb[0].mxu0 %v126
  %v1026 = vpop.f32.mrb[0].mxu0
  %v1027 = vadd.f32 %v914, %v1026
  %v1028 = vpop.f32.mrb[0].mxu0
  %v1029 = vadd.f32 %v916, %v1028
  %v1030 = vpop.f32.mrb[0].mxu0
  %v1031 = vadd.f32 %v918, %v1030
  %v1032 = vpop.f32.mrb[0].mxu0
  %v1033 = vadd.f32 %v920, %v1032
  %1034 = vmatprep.mubr.bf16.mxu0 %v133
  %1035 = vmatmul.mubr.bf16.gmra.mrb[0].mxu0 %v132
  %v1036 = vpop.f32.mrb[0].mxu0
  %v1037 = vadd.f32 %v924, %v1036
  %v1038 = vpop.f32.mrb[0].mxu0
  %v1039 = vadd.f32 %v926, %v1038
  %v1040 = vpop.f32.mrb[0].mxu0
  %v1041 = vadd.f32 %v928, %v1040
  %v1042 = vpop.f32.mrb[0].mxu0
  %v1043 = vadd.f32 %v930, %v1042
  %1044 = vmatprep.mubr.bf16.mxu0 %v139
  %1045 = vmatmul.mubr.bf16.gmra.mrb[0].mxu0 %v138
  %v1046 = vpop.f32.mrb[0].mxu0
  %v1047 = vadd.f32 %v934, %v1046
  %v1048 = vpop.f32.mrb[0].mxu0
  %v1049 = vadd.f32 %v936, %v1048
  %v1050 = vpop.f32.mrb[0].mxu0
  %v1051 = vadd.f32 %v938, %v1050
  %v1052 = vpop.f32.mrb[0].mxu0
  %v1053 = vadd.f32 %v940, %v1052
  %1054 = vmatprep.mubr.bf16.mxu0 %v145
  %1055 = vmatmul.mubr.bf16.gmra.mrb[0].mxu0 %v144
  %v1056 = vpop.f32.mrb[0].mxu0
  %v1057 = vadd.f32 %v944, %v1056
  %v1058 = vpop.f32.mrb[0].mxu0
  %v1059 = vadd.f32 %v946, %v1058
  %v1060 = vpop.f32.mrb[0].mxu0
  %v1061 = vadd.f32 %v948, %v1060
  %v1062 = vpop.f32.mrb[0].mxu0
  %v1063 = vadd.f32 %v950, %v1062
  %1064 = vmatprep.mubr.bf16.mxu0 %v151
  %1065 = vmatmul.mubr.bf16.gmra.mrb[0].mxu0 %v150
  %v1066 = vpop.f32.mrb[0].mxu0
  %v1067 = vadd.f32 %v954, %v1066
  %v1068 = vpop.f32.mrb[0].mxu0
  %v1069 = vadd.f32 %v956, %v1068
  %v1070 = vpop.f32.mrb[0].mxu0
  %v1071 = vadd.f32 %v958, %v1070
  %v1072 = vpop.f32.mrb[0].mxu0
  %v1073 = vadd.f32 %v960, %v1072
  %1074 = vmatprep.mubr.bf16.mxu0 %v157
  %1075 = vmatmul.mubr.bf16.gmra.mrb[0].mxu0 %v156
  %v1076 = vpop.f32.mrb[0].mxu0
  %v1077 = vadd.f32 %v964, %v1076
  %v1078 = vpop.f32.mrb[0].mxu0
  %v1079 = vadd.f32 %v966, %v1078
  %v1080 = vpop.f32.mrb[0].mxu0
  %v1081 = vadd.f32 %v968, %v1080
  %v1082 = vpop.f32.mrb[0].mxu0
  %v1083 = vadd.f32 %v970, %v1082
  %1084 = vdwg.mxu0
  %1085 = vst [vmem:[%s3] sm:$0xff] %v1007
  %vm1086 = vcmask 523264
  %1087 = vst.msk [vmem:[%s3 + $0x8] sm:$0xff] %vm1086, %v1009
  %1088 = vst [vmem:[%s3 + $0x10] sm:$0xff] %v1011
  %1089 = vst.msk [vmem:[%s3 + $0x18] sm:$0xff] %vm1086, %v1013
  %1090 = vst [vmem:[%s3 + $0x20] sm:$0xff] %v1017
  %1091 = vst.msk [vmem:[%s3 + $0x28] sm:$0xff] %vm1086, %v1019
  %1092 = vst [vmem:[%s3 + $0x30] sm:$0xff] %v1021
  %1093 = vst.msk [vmem:[%s3 + $0x38] sm:$0xff] %vm1086, %v1023
  %1094 = vst [vmem:[%s3 + $0x40] sm:$0xff] %v1027
  %1095 = vst.msk [vmem:[%s3 + $0x48] sm:$0xff] %vm1086, %v1029
  %1096 = vst [vmem:[%s3 + $0x50] sm:$0xff] %v1031
  %1097 = vst.msk [vmem:[%s3 + $0x58] sm:$0xff] %vm1086, %v1033
  %1098 = vst [vmem:[%s3 + $0x60] sm:$0xff] %v1037
  %1099 = vst.msk [vmem:[%s3 + $0x68] sm:$0xff] %vm1086, %v1039
  %1100 = vst [vmem:[%s3 + $0x70] sm:$0xff] %v1041
  %1101 = vst.msk [vmem:[%s3 + $0x78] sm:$0xff] %vm1086, %v1043
  %1102 = vst [vmem:[%s3 + $0x80] sm:$0xff] %v1047
  %1103 = vst.msk [vmem:[%s3 + $0x88] sm:$0xff] %vm1086, %v1049
  %1104 = vst [vmem:[%s3 + $0x90] sm:$0xff] %v1051
  %1105 = vst.msk [vmem:[%s3 + $0x98] sm:$0xff] %vm1086, %v1053
  %1106 = vst [vmem:[%s3 + $0xa0] sm:$0xff] %v1057
  %1107 = vst.msk [vmem:[%s3 + $0xa8] sm:$0xff] %vm1086, %v1059
  %1108 = vst [vmem:[%s3 + $0xb0] sm:$0xff] %v1061
  %1109 = vst.msk [vmem:[%s3 + $0xb8] sm:$0xff] %vm1086, %v1063
  %1110 = vst [vmem:[%s3 + $0xc0] sm:$0xff] %v1067
  %1111 = vst.msk [vmem:[%s3 + $0xc8] sm:$0xff] %vm1086, %v1069
  %1112 = vst [vmem:[%s3 + $0xd0] sm:$0xff] %v1071
  %1113 = vst.msk [vmem:[%s3 + $0xd8] sm:$0xff] %vm1086, %v1073
  %1114 = vst [vmem:[%s3 + $0xe0] sm:$0xff] %v1077
  %1115 = vst.msk [vmem:[%s3 + $0xe8] sm:$0xff] %vm1086, %v1079
  %1116 = vst [vmem:[%s3 + $0xf0] sm:$0xff] %v1081
  %1117 = vst.msk [vmem:[%s3 + $0xf8] sm:$0xff] %vm1086, %v1083
  // Predicated region
  $region14: #{tpu_custom_call.1} parent=0 // pred_check
    _
  $region15: #{tpu_custom_call.1} parent=0 // pred_check_branch
    %1119 = sbr.rel (0) target = $region17
  $region16: #{tpu_custom_call.1} parent=0 // pred_region
    _
  $region17: #{tpu_custom_call.1} parent=0 // pred_fallthru
    _
  // Predicated region
  $region18: #{tpu_custom_call.1} parent=0 // pred_check
    _
  $region19: #{tpu_custom_call.1} parent=0 // pred_check_branch
    %1121 = sbr.rel (0) target = $region21
  $region20: #{tpu_custom_call.1} parent=0 // pred_region
    _
  $region21: #{tpu_custom_call.1} parent=0 // pred_fallthru
    _

</llo_original>
